<compile_context>
chip_gen: v5e
topology: v5e:2x2
jax: 0.10.0
libtpu: 0.0.40
codegen_flags: <defaults>
</compile_context>

<pallas_src>
import jax
import jax.numpy as jnp
from jax.experimental import pallas as pl
from jax.experimental.pallas import tpu as pltpu


_LANE = 128
_SUBLANE = 8


def _round_up(x, m):
    return ((x + m - 1) // m) * m


def _cdiv(a, b):
    return (a + b - 1) // b


def _device_kind():
    try:
        return jax.devices()[0].device_kind.lower()
    except Exception:
        return ""


def _vmem_capacity_bytes():
    try:
        return int(pltpu.get_tpu_info().vmem_capacity_bytes)
    except Exception:
        pass
    kind = _device_kind()
    if "v7" in kind or "7x" in kind:
        return 64 * 1024 * 1024          # v7x: 64 MiB per TensorCore
    return 128 * 1024 * 1024             # v5e / v6e (and safe default)


def _preferred_col_multiple():
    # v6e / v7x MXU is 256 wide; v4 / v5e / v5p are 128.
    kind = _device_kind()
    if "v4" in kind or "v5" in kind:
        return _LANE
    return 2 * _LANE


def _num_tensorcores():
    # v4 / v5p megacore and v7x expose 2 TensorCores per device.
    kind = _device_kind()
    if "v4" in kind or "v5p" in kind or "v7" in kind or "7x" in kind:
        return 2
    return 1


def _atom_type_kernel(h_ref, w_ref, b_ref, out_ref):
    """One (row_tile x col_tile) tile of the fused linear head + NaN sanitisation.

    h_ref   : (row_tile, D)        hidden-state rows
    w_ref   : (D, col_tile)        pre-transposed weight slab
    b_ref   : (1, col_tile)        bias slab (f32)
    out_ref : (row_tile, col_tile) output logits
    """
    logits = jnp.dot(h_ref[...], w_ref[...], preferred_element_type=jnp.float32)
    logits = logits + b_ref[...]
    out_ref[...] = logits.astype(out_ref.dtype)

    # TODO(synk): PyTorch gates nan_to_num on a *whole-tensor* isnan().any();
    # here the gate is per output tile (and may fire spuriously on garbage rows
    # of a partial block). Identical behaviour on finite inputs.
    @pl.when(jnp.any(jnp.isnan(logits)))
    def _():
        f = jnp.finfo(out_ref.dtype)   # clamp in the *output* dtype's range so
        san = jnp.where(jnp.isnan(logits), jnp.float32(0.0), logits)
        san = jnp.clip(san, float(f.min), float(f.max))
        out_ref[...] = san.astype(out_ref.dtype)


def _choose_tiles(n_rows, d, v, h_bytes, w_bytes, out_bytes, vmem_budget,
                  col_multiple, n_cores):
    """Pick (row_tile, col_tile, cols_outer) against a per-generation VMEM budget.

    Accounts for double-buffered hidden/weight/bias/output tiles plus the single
    f32 epilogue intermediate (MXU accumulator / sanitisation staging).
    """
    col_cap = _round_up(v, _LANE)

    # Column tile: keep the whole vocab resident when the (double-buffered)
    # weight slab fits in half the budget; otherwise shrink in MXU-width
    # multiples (256 on v6e/v7x, 128 on v5e).
    col_tile = col_cap
    while col_tile > col_multiple and 2 * d * col_tile * w_bytes > vmem_budget // 2:
        col_tile = max(col_multiple, (col_tile // 2 // col_multiple) * col_multiple)
    col_tile = min(col_tile, col_cap)

    # Row tile against the remaining budget.
    # Note: the weight/bias slab could be single-buffered (pl.Buffered(1)) when
    # the vocab fits in one column block; kept double-buffered here (and in the
    # budget) for portability across JAX versions.
    fixed = 2 * (d * col_tile * w_bytes + col_tile * 4)               # weight + bias (dbl-buf)
    per_row = (2 * (d * h_bytes + col_tile * out_bytes)               # hidden + output (dbl-buf)
               + col_tile * 4)                                        # f32 epilogue intermediate
    avail = max(vmem_budget - fixed, per_row * _SUBLANE)
    row_tile = min(1024, avail // per_row, _round_up(n_rows, _SUBLANE))
    row_tile = max(_SUBLANE, (row_tile // _SUBLANE) * _SUBLANE)

    n_row_blocks = _cdiv(n_rows, row_tile)
    n_col_blocks = _cdiv(v, col_tile)

    # Only force a 2-way row split when the chip actually has 2 TensorCores and
    # no grid axis already provides >= 2 steps.
    if n_cores >= 2 and n_row_blocks * n_col_blocks < 2 and n_rows >= 2 * _SUBLANE:
        row_tile = max(_SUBLANE, (_cdiv(n_rows, 2) // _SUBLANE) * _SUBLANE)
        n_row_blocks = _cdiv(n_rows, row_tile)

    # When the vocab is column-tiled, order the grid so the operand that would
    # otherwise be re-streamed the most stays resident across the inner axis.
    cols_outer = False
    if n_col_blocks > 1:
        rows_outer_traffic = n_row_blocks * d * v * w_bytes + n_rows * d * h_bytes
        cols_outer_traffic = n_col_blocks * n_rows * d * h_bytes + d * v * w_bytes
        cols_outer = cols_outer_traffic < rows_outer_traffic

    return int(row_tile), int(col_tile), cols_outer


def prepare_atom_type_params(weight, bias, compute_dtype=None):
    """One-time parameter preparation (run at init, OUTSIDE the per-step hot path).

    weight: (V, D) nn.Linear weight; bias: (V,)
    Returns:
      w_t: (D, Vp) transposed weight, zero-padded to a lane multiple, cast to
           `compute_dtype` (pass bf16 to keep the head bf16 end-to-end).
      b_p: (1, Vp) f32 bias slab.
    """
    v, d = weight.shape
    if compute_dtype is None:
        compute_dtype = weight.dtype
    vp = _round_up(v, _LANE)
    w_t = jnp.zeros((d, vp), compute_dtype).at[:, :v].set(
        jnp.asarray(weight, compute_dtype).T)
    b_p = jnp.zeros((1, vp), jnp.float32).at[0, :v].set(bias.astype(jnp.float32))
    return w_t, b_p


def atom_type_decoder(hidden_states, w_t, b_p, vocab_size=None):
    """AtomTypeDecoder.forward hot path.

    hidden_states: (B, S, D)
    w_t, b_p:      prepared by prepare_atom_type_params()
    vocab_size:    true V (w_t may be lane-padded); must be static under jit.
    Returns {"type_logits": (B, S, V)} in hidden_states.dtype.
    """
    B, S, D = hidden_states.shape
    D2, Vp = w_t.shape
    assert D == D2 and b_p.shape == (1, Vp)
    V = Vp if vocab_size is None else int(vocab_size)
    assert 0 < V <= Vp

    N = B * S
    out_dtype = hidden_states.dtype

    h_bytes = jnp.dtype(hidden_states.dtype).itemsize
    w_bytes = jnp.dtype(w_t.dtype).itemsize
    out_bytes = jnp.dtype(out_dtype).itemsize

    vmem_cap = _vmem_capacity_bytes()
    vmem_budget = max(vmem_cap // 3, 8 * 1024 * 1024)

    row_tile, col_tile, cols_outer = _choose_tiles(
        N, D, V, h_bytes, w_bytes, out_bytes, vmem_budget,
        _preferred_col_multiple(), _num_tensorcores())

    n_row_blocks = _cdiv(N, row_tile)
    n_col_blocks = _cdiv(V, col_tile)

    # Tight VMEM limit: actual tile footprint (incl. the f32 epilogue
    # intermediate) + ~50% headroom, never above 3/4 of physical VMEM.
    footprint = (2 * row_tile * D * h_bytes
                 + 2 * D * col_tile * w_bytes
                 + 2 * col_tile * 4
                 + 2 * row_tile * col_tile * out_bytes
                 + row_tile * col_tile * 4)
    vmem_limit = int(min(max(footprint * 3 // 2 + (4 << 20), 16 << 20),
                         vmem_cap * 3 // 4))

    # No per-call padding or output slicing: Pallas masks the final partial
    # row / column blocks.
    h2d = hidden_states.reshape(N, D)

    if cols_outer:
        grid = (n_col_blocks, n_row_blocks)
        h_map = lambda j, i: (i, 0)
        w_map = lambda j, i: (0, j)
        b_map = lambda j, i: (0, j)
        o_map = lambda j, i: (i, j)
    else:
        grid = (n_row_blocks, n_col_blocks)
        h_map = lambda i, j: (i, 0)
        w_map = lambda i, j: (0, j)
        b_map = lambda i, j: (0, j)
        o_map = lambda i, j: (i, j)

    logits2d = pl.pallas_call(
        _atom_type_kernel,
        out_shape=jax.ShapeDtypeStruct((N, V), out_dtype),
        grid_spec=pltpu.PrefetchScalarGridSpec(
            num_scalar_prefetch=0,
            grid=grid,
            in_specs=[
                pl.BlockSpec((row_tile, D), h_map),    # hidden rows
                pl.BlockSpec((D, col_tile), w_map),    # weight slab
                pl.BlockSpec((1, col_tile), b_map),    # bias slab
            ],
            out_specs=pl.BlockSpec((row_tile, col_tile), o_map),
        ),
        compiler_params=pltpu.CompilerParams(
            dimension_semantics=("parallel", "parallel"),
            vmem_limit_bytes=vmem_limit,
        ),
    )(h2d, w_t, b_p)

    return {"type_logits": logits2d.reshape(B, S, V)}


def atom_type_decoder_from_linear(hidden_states, weight, bias):
    """Convenience wrapper matching the PyTorch parameter layout (prepares per call;
    prefer prepare_atom_type_params() once + atom_type_decoder() in a training/step loop)."""
    w_t, b_p = prepare_atom_type_params(weight, bias, compute_dtype=hidden_states.dtype)
    return atom_type_decoder(hidden_states, w_t, b_p, vocab_size=weight.shape[0])


def _reference(hidden_states, weight, bias):
    """Pure-JAX reference mirroring the PyTorch forward (finite-input path)."""
    logits = jnp.einsum("bsd,vd->bsv", hidden_states, weight) + bias
    f32 = jnp.finfo(logits.dtype)
    logits = jnp.where(jnp.isnan(logits), 0.0, logits)
    logits = jnp.clip(logits, f32.min, f32.max)
    return logits


if __name__ == "__main__":
    key = jax.random.PRNGKey(0)
    k_h, k_w, k_b = jax.random.split(key, 3)

    # Small shapes consistent with the module: batch=2, seq=8, d_model=32, vocab=100.
    B, S, D, V = 2, 8, 32, 100

    hidden_states = jax.random.normal(k_h, (B, S, D), dtype=jnp.float32)
    # Deterministic synthetic nn.Linear(d_model, vocab_size) parameters.
    bound = 1.0 / (D ** 0.5)
    weight = jax.random.uniform(k_w, (V, D), minval=-bound, maxval=bound,
                                dtype=jnp.float32)
    bias = jax.random.uniform(k_b, (V,), minval=-bound, maxval=bound,
                              dtype=jnp.float32)

    # One-time parameter preparation (outside the hot path).
    w_t, b_p = prepare_atom_type_params(weight, bias, compute_dtype=hidden_states.dtype)

    decode = jax.jit(atom_type_decoder, static_argnames=("vocab_size",))
    out = decode(hidden_states, w_t, b_p, vocab_size=V)
    jax.block_until_ready(out)

    ref = _reference(hidden_states, weight, bias)
    assert out["type_logits"].shape == (B, S, V)
    assert out["type_logits"].dtype == hidden_states.dtype
    assert jnp.allclose(out["type_logits"], ref, atol=1e-5, rtol=1e-5)

    print("KERNEL_OK")
</pallas_src>

<mosaic_0001>
module attributes {stable_mosaic.version = 11 : i64} {
  func.func @_atom_type_kernel(%arg0: i32, %arg1: i32, %arg2: memref<16x32xf32, #tpu.memory_space<vmem>>, %arg3: memref<32x128xf32, #tpu.memory_space<vmem>>, %arg4: memref<1x128xf32, #tpu.memory_space<vmem>>, %arg5: memref<16x128xf32, #tpu.memory_space<vmem>>) attributes {dimension_semantics = [#tpu.dimension_semantics<parallel>, #tpu.dimension_semantics<parallel>], iteration_bounds = array<i64: 1, 1>, scalar_prefetch = 0 : i64, scratch_operands = 0 : i64, tpu.core_type = #tpu.core_type<tc>, window_params = [{transform_indices = @transform_0, window_bounds = array<i64: 16, 32>}, {transform_indices = @transform_1, window_bounds = array<i64: 32, 128>}, {transform_indices = @transform_2, window_bounds = array<i64: 1, 128>}, {transform_indices = @transform_3, window_bounds = array<i64: 16, 128>}]} {
    %c0 = arith.constant 0 : index
    %c0_0 = arith.constant 0 : index
    %0 = vector.load %arg2[%c0, %c0_0] : memref<16x32xf32, #tpu.memory_space<vmem>>, vector<16x32xf32>
    %c0_1 = arith.constant 0 : index
    %c0_2 = arith.constant 0 : index
    %1 = vector.load %arg3[%c0_1, %c0_2] : memref<32x128xf32, #tpu.memory_space<vmem>>, vector<32x128xf32>
    %cst = arith.constant dense<0.000000e+00> : vector<16x128xf32>
    %2 = tpu.matmul %0, %1, %cst {dimension_numbers = #tpu.dot_dimension_numbers<[1], [0], [0], [1], [0, 0, 1, 1], [], []>} : vector<16x32xf32>, vector<32x128xf32>, vector<16x128xf32> -> vector<16x128xf32>
    %c0_3 = arith.constant 0 : index
    %c0_4 = arith.constant 0 : index
    %3 = vector.load %arg4[%c0_3, %c0_4] : memref<1x128xf32, #tpu.memory_space<vmem>>, vector<1x128xf32>
    %4 = vector.broadcast %3 : vector<1x128xf32> to vector<16x128xf32>
    %5 = arith.addf %2, %4 : vector<16x128xf32>
    %c0_5 = arith.constant 0 : index
    %c0_6 = arith.constant 0 : index
    %6 = vector.load %arg5[%c0_5, %c0_6] : memref<16x128xf32, #tpu.memory_space<vmem>>, vector<16x128xf32>
    tpu.vector_store %arg5[%c0_5, %c0_6], %5 {strides = array<i32>} : memref<16x128xf32, #tpu.memory_space<vmem>>, vector<16x128xf32>,
    %7 = arith.cmpf one, %5, %5 : vector<16x128xf32>
    %cst_7 = arith.constant 1.000000e+00 : f32
    %cst_8 = arith.constant 0.000000e+00 : f32
    %8 = vector.broadcast %cst_7 : f32 to vector<16x128xf32>
    %9 = vector.broadcast %cst_8 : f32 to vector<16x128xf32>
    %10 = arith.select %7, %8, %9 : vector<16x128xi1>, vector<16x128xf32>
    %11 = vector.shape_cast %10 : vector<16x128xf32> to vector<1x16x128xf32>
    %cst_9 = arith.constant dense<0xFF800000> : vector<1xf32>
    %12 = vector.multi_reduction <maximumf>, %11, %cst_9 [1, 2] : vector<1x16x128xf32> to vector<1xf32>
    %13 = vector.shape_cast %12 : vector<1xf32> to vector<1x1x1xf32>
    %14 = vector.extract %13[0, 0, 0] : f32 from vector<1x1x1xf32>
    %cst_10 = arith.constant 0.000000e+00 : f32
    %15 = arith.cmpf ogt, %14, %cst_10 : f32
    %16 = arith.extui %15 : i1 to i32
    %c0_i32 = arith.constant 0 : i32
    %17 = arith.cmpi ne, %16, %c0_i32 : i32
    scf.if %17 {
      %18 = arith.cmpf one, %5, %5 : vector<16x128xf32>
      %cst_11 = arith.constant 0.000000e+00 : f32
      %19 = vector.broadcast %cst_11 : f32 to vector<16x128xf32>
      %20 = arith.select %18, %19, %5 : vector<16x128xi1>, vector<16x128xf32>
      %cst_12 = arith.constant -3.40282347E+38 : f32
      %cst_13 = arith.constant 3.40282347E+38 : f32
      %21 = vector.broadcast %cst_12 : f32 to vector<16x128xf32>
      %22 = arith.maximumf %21, %20 : vector<16x128xf32>
      %23 = vector.broadcast %cst_13 : f32 to vector<16x128xf32>
      %24 = arith.minimumf %23, %22 : vector<16x128xf32>
      %c0_14 = arith.constant 0 : index
      %c0_15 = arith.constant 0 : index
      %25 = vector.load %arg5[%c0_14, %c0_15] : memref<16x128xf32, #tpu.memory_space<vmem>>, vector<16x128xf32>
      tpu.vector_store %arg5[%c0_14, %c0_15], %24 {strides = array<i32>} : memref<16x128xf32, #tpu.memory_space<vmem>>, vector<16x128xf32>,
    } else {
    }
    return
  }
  func.func @transform_0(%arg0: i32, %arg1: i32) -> (i32, i32) {
    %c0_i32 = arith.constant 0 : i32
    %c0_i32_0 = arith.constant 0 : i32
    return %arg0, %c0_i32 : i32, i32
  }
  func.func @transform_1(%arg0: i32, %arg1: i32) -> (i32, i32) {
    %c0_i32 = arith.constant 0 : i32
    %c0_i32_0 = arith.constant 0 : i32
    return %c0_i32, %arg1 : i32, i32
  }
  func.func @transform_2(%arg0: i32, %arg1: i32) -> (i32, i32) {
    %c0_i32 = arith.constant 0 : i32
    %c0_i32_0 = arith.constant 0 : i32
    return %c0_i32, %arg1 : i32, i32
  }
  func.func @transform_3(%arg0: i32, %arg1: i32) -> (i32, i32) {
    %c0_i32 = arith.constant 0 : i32
    return %arg0, %arg1 : i32, i32
  }
}

</mosaic_0001>

<llo_original>
// kernel: atom_type_decoder.1
$region0: #{atom_type_decoder.1}
  #allocation0 [shape = 'u32[]', space=smem, size = 0x4, offset = 0x4, fixed_abs, tag = 'smem constant byte address 0x4 - core index']
  #allocation1 [shape = 'u32[72,128]{1,0:T(1,128)}', space=vmem, size = 0x9000, scoped, tag = 'internal scratch']
  %s0 = inlined_call_operand.hbm [shape: f32[16,32], index: 0, kind: input, shape index: {}]
  %s1 = inlined_call_operand.hbm [shape: f32[32,128], index: 1, kind: input, shape index: {}]
  %s2 = inlined_call_operand.vmem [shape: f32[1,128], index: 2, kind: input, shape index: {}]
  %s3 = inlined_call_operand.hbm [shape: f32[16,100], index: 3, kind: output, shape index: {}]
  %s4 = sld [smem:[#allocation0]]
  $region34: #{atom_type_decoder.1} parent=0
    _
  %s6 = ssub.s32 1, %s4
  %s7 = scalar_select 0, %s6, %s4
  $region1: #{atom_type_decoder.1} parent=0
    #allocation2 [shape = 'u8[8192]{0}', space=vmem, size = 0x2000, scoped, tag = 'input window, operand 0, single buffered']
    #allocation3 [shape = 's32[1]{0}', space=sflag, size = 0x4, scoped, tag = 'scoped memory for atom_type_decoder.1']
    #allocation4 [shape = 's32[1]{0}', space=sflag, size = 0x4, scoped, tag = 'scoped memory for atom_type_decoder.1']
    #allocation5 [shape = 'u8[16384]{0}', space=vmem, size = 0x4000, scoped, tag = 'input window, operand 1, single buffered']
    #allocation6 [shape = 's32[1]{0}', space=sflag, size = 0x4, scoped, tag = 'scoped memory for atom_type_decoder.1']
    #allocation7 [shape = 'u8[8192]{0}', space=vmem, size = 0x2000, scoped, tag = 'output window, operand 0, single buffered']
    %8 = vsyncpa [#allocation3], 0
    %9 = vsyncpa [#allocation6], 0
    %10 = vsyncpa [#allocation4], 0
    // Predicated region
    $region2: #{atom_type_decoder.1} parent=1 // pred_check
      _
    $region3: #{atom_type_decoder.1} parent=1 // pred_check_branch
      %12 = sbr.rel (0) target = $region5
    $region4: #{atom_type_decoder.1} parent=1 // pred_region
      %14 = vsyncadd [#allocation3], 0
      %s15 = sshll.u32 %s0, 4
      %s16 = int_to_ptr.hbm [resolvable:$true] %s15
      %s17 = sshll.u32 [#allocation2], 4
      %s18 = int_to_ptr.vmem [resolvable:$true] %s17
      %23 = dma.hbm_to_vmem [thread:$0]  %s16, 256, %s18, [#allocation3], 128, 128, 8
    $region5: #{atom_type_decoder.1} parent=1 // pred_fallthru
      _
    // Predicated region
    $region6: #{atom_type_decoder.1} parent=1 // pred_check
      _
    $region7: #{atom_type_decoder.1} parent=1 // pred_check_branch
      %25 = sbr.rel (0) target = $region9
    $region8: #{atom_type_decoder.1} parent=1 // pred_region
      %27 = vsyncadd [#allocation6], 0
      %s28 = sshll.u32 %s1, 4
      %s29 = int_to_ptr.hbm [resolvable:$true] %s28
      %s30 = sshll.u32 [#allocation5], 4
      %s31 = int_to_ptr.vmem [resolvable:$true] %s30
      %36 = dma.hbm_to_vmem [thread:$0]  %s29, 512, %s31, [#allocation6], 128, 128, 8
    $region9: #{atom_type_decoder.1} parent=1 // pred_fallthru
      _
    // Predicated region
    $region10: #{atom_type_decoder.1} parent=1 // pred_check
      _
    $region11: #{atom_type_decoder.1} parent=1 // pred_check_branch
      %38 = sbr.rel (0) target = $region13
    $region12: #{atom_type_decoder.1} parent=1 // pred_region
      _
    $region13: #{atom_type_decoder.1} parent=1 // pred_fallthru
      _
    // Predicated region
    $region14: #{atom_type_decoder.1} parent=1 // pred_check
      _
    $region15: #{atom_type_decoder.1} parent=1 // pred_check_branch
      %40 = sbr.rel (0) target = $region17
    $region16: #{atom_type_decoder.1} parent=1 // pred_region
      %42 = dma.done [#allocation3], 256
    $region17: #{atom_type_decoder.1} parent=1 // pred_fallthru
      _
    // Predicated region
    $region18: #{atom_type_decoder.1} parent=1 // pred_check
      _
    $region19: #{atom_type_decoder.1} parent=1 // pred_check_branch
      %44 = sbr.rel (0) target = $region21
    $region20: #{atom_type_decoder.1} parent=1 // pred_region
      %46 = dma.done [#allocation6], 512
    $region21: #{atom_type_decoder.1} parent=1 // pred_fallthru
      _
    %v47 = vld [vmem:[#allocation2] sm:$0xff]
    %v48 = vld [vmem:[#allocation2 + $0x8] sm:$0xff]
    %v49 = vld [vmem:[#allocation5] sm:$0xff]
    %v50 = vld [vmem:[#allocation5 + $0x8] sm:$0xff]
    %v51 = vld [vmem:[#allocation5 + $0x10] sm:$0xff]
    %v52 = vld [vmem:[#allocation5 + $0x18] sm:$0xff]
    %v53 = vld [vmem:[%s2] sm:$0x1]
    %v55 = vperm.slane %v53, 0
    %vm57 = vcmask 261120
    %v59 = vsel %vm57, %v47, 0
    %v62 = vsel %vm57, %v48, 0
    %64 = vmatpush.msra.mxu0 0.0
    %65 = vmatpush.msra.mxu0 0.0
    %66 = vmatpush.msra.mxu0 0.0
    %67 = vmatpush.msra.mxu0 0.0
    %68 = vmatpush.msra.mxu0 0.0
    %69 = vmatpush.msra.mxu0 0.0
    %70 = vmatpush.msra.mxu0 0.0
    %71 = vmatpush.msra.mxu0 0.0
    %72 = vmatpush.msra.mxu0 0.0
    %73 = vmatpush.msra.mxu0 0.0
    %74 = vmatpush.msra.mxu0 0.0
    %75 = vmatpush.msra.mxu0 0.0
    %76 = vmatpush.msra.mxu0 %v52
    %77 = vmatpush.msra.mxu0 %v51
    %78 = vmatpush.msra.mxu0 %v50
    %79 = vmatpush.msra.mxu0 %v49
    %80 = vmatmul.f32.gmra.mxu0 %v59
    %v81 = vpop.f32.mrf.mxu0
    %v82 = vadd.f32 %v55, %v81
    %83 = vmatmul.f32.gmra.mxu0 %v62
    %v84 = vpop.f32.mrf.mxu0
    %v85 = vadd.f32 %v55, %v84
    %86 = vdwg.mxu0
    %87 = vst [vmem:[#allocation7] sm:$0xff] %v82
    %88 = vst [vmem:[#allocation7 + $0x8] sm:$0xff] %v85
    %vm89 = vcmp.ne.f32.partialorder %v82, %v82
    %vm90 = vcmp.ne.f32.partialorder %v85, %v85
    %v91 = vsel %vm89, 1.0, 0.0
    %v92 = vsel %vm90, 1.0, 0.0
    %v93 = vmax.f32 %v91, %v92
    %94 = vmax.xlane.f32.xlu0 %v93
    %v95 = vpop.xlane.xlu0 %94
    %v96 = vrot.slane %v95, 4
    %v97 = vmax.f32 %v95, %v96
    %v98 = vrot.slane %v97, 2
    %v99 = vmax.f32 %v97, %v98
    %v100 = vrot.slane %v99, 1
    %v101 = vmax.f32 %v99, %v100
    %s102 = vtos %v101
    %p103 = scmp.gt.f32.partialorder %s102, 0.0
    // Predicated region
    $region22: #{atom_type_decoder.1} parent=1 // pred_check
      %p104 = pneg %p103
    $region23: #{atom_type_decoder.1} parent=1 // pred_check_branch
      %106 = sbr.rel (%p104) target = $region25
    $region24: #{atom_type_decoder.1} parent=1 // pred_region
      %v107 = vsel %vm89, 0.0, %v82
      %v108 = vsel %vm90, 0.0, %v85
      %v109 = vmax.f32 %v107, -3.4028235e+38
      %v110 = vmax.f32 %v108, -3.4028235e+38
      %v111 = vmin.f32 %v109, 3.4028235e+38
      %v112 = vmin.f32 %v110, 3.4028235e+38
      %113 = vst [vmem:[#allocation7] sm:$0xff] %v111
      %114 = vst [vmem:[#allocation7 + $0x8] sm:$0xff] %v112
    $region25: #{atom_type_decoder.1} parent=1 // pred_fallthru
      _
    // Predicated region
    $region26: #{atom_type_decoder.1} parent=1 // pred_check
      _
    $region27: #{atom_type_decoder.1} parent=1 // pred_check_branch
      %116 = sbr.rel (0) target = $region29
    $region28: #{atom_type_decoder.1} parent=1 // pred_region
      %118 = vsyncadd [#allocation4], 0
      %s119 = sshll.u32 [#allocation7], 4
      %s120 = int_to_ptr.vmem [resolvable:$true] %s119
      %s121 = sshll.u32 %s3, 4
      %s122 = int_to_ptr.hbm [resolvable:$true] %s121
      %127 = dma.vmem_to_hbm [thread:$0]  %s120, 256, %s122, [#allocation4], 128, 128, 8
    $region29: #{atom_type_decoder.1} parent=1 // pred_fallthru
      _
    // Predicated region
    $region30: #{atom_type_decoder.1} parent=1 // pred_check
      _
    $region31: #{atom_type_decoder.1} parent=1 // pred_check_branch
      %129 = sbr.rel (0) target = $region33
    $region32: #{atom_type_decoder.1} parent=1 // pred_region
      %131 = dma.done [#allocation4], 256
    $region33: #{atom_type_decoder.1} parent=1 // pred_fallthru
      _
    %132 = vsyncpa [#allocation3], 1
    %133 = vsyncpa [#allocation6], 1
    %134 = vsyncpa [#allocation4], 1

</llo_original>
